<compile_context>
chip_gen: v5e
topology: v5e:2x2
jax: 0.10.0
libtpu: 0.0.40
codegen_flags: <defaults>
</compile_context>

<pallas_src>
import functools
import math

import jax
import jax.numpy as jnp
from jax import lax
from jax.experimental import pallas as pl
from jax.experimental.pallas import tpu as pltpu

VERY_SMALL_NUMBER = 1e-12


def _round_up(x: int, m: int) -> int:
    return (x + m - 1) // m * m


def _vmem_budget_bytes() -> int:
    """~75% of per-core VMEM: ~96 MiB on v5e/v6e, ~48 MiB on v7x."""
    try:
        cap = int(pltpu.get_tpu_info().vmem_capacity_bytes)
    except Exception:
        cap = 64 * 1024 * 1024  # conservative fallback (v7x physical)
    return cap * 3 // 4


def _choose_tile_n(N, A_p, f_in_p, f_p, out_bytes, budget):
    # Resident (effectively single-buffered) blocks: W, tmp^T f32 scratch,
    # tmp^T bf16 (pass-1 out block + pass-2 resident input), column sums.
    resident = (f_in_p * f_p * 2
                + f_p * A_p * 4
                + 3 * f_p * A_p * 2
                + 8 * A_p * 4)
    # Per-row streamed bytes, double-buffered (adj + x + out tile + recip_row).
    per_row = 2 * (A_p * 2 + f_in_p * 2 + f_p * out_bytes + 8)
    avail = budget - resident
    if avail <= per_row * 16:
        # TODO(synk): resident tmp^T (A x F_out) nearly exhausts the VMEM
        # budget; would need an additional grid split over F_out / A.
        return 16
    tile = min(avail // per_row, 2048, _round_up(N, 16))
    return max(16, int(tile // 16) * 16)


# ---------------------------------------------------------------------------
# Pass 1 (reduction over N tiles, grid axis "arbitrary"):
#   tmp^T_acc += (x_tile @ W)^T-contracted-with adj_tile    (F_p, A_p)  f32
#   colsum    += sum_rows(adj_tile)                          (1,  A_p)  f32
#   recip_row[tile] = 1 / clamp(sum_cols(adj_tile), eps)     (tn, 1)    f32
#   final step: tmp^T_out = (tmp^T_acc * 1/colsum)  as bf16  (F_p, A_p)
# ---------------------------------------------------------------------------
def _anchor_reduce_kernel(x_ref, adj_ref, w_ref, tmpt_ref, rrow_ref,
                          tmpt_acc, colsum_acc):
    i = pl.program_id(0)

    @pl.when(i == 0)
    def _init():
        tmpt_acc[...] = jnp.zeros_like(tmpt_acc)
        colsum_acc[...] = jnp.zeros_like(colsum_acc)

    adj = adj_ref[...]                                         # (tn, A_p) bf16
    adj_f32 = adj.astype(jnp.float32)

    colsum_acc[...] += jnp.sum(adj_f32, axis=0, keepdims=True)          # (1, A_p)
    rowsum = jnp.sum(adj_f32, axis=1, keepdims=True)                    # (tn, 1)
    rrow_ref[...] = pl.reciprocal(
        jnp.maximum(rowsum, VERY_SMALL_NUMBER), approx=False)

    # support = x @ W : bf16 operands, f32 MXU accumulation.
    support = jnp.dot(x_ref[...], w_ref[...],
                      preferred_element_type=jnp.float32)               # (tn, F_p)

    # tmp^T += support^T-contraction with adj (TN dot_general over the node
    # axis) -> (F_p, A_p); no transposed tile is materialized.
    tmpt_acc[...] += lax.dot_general(
        support.astype(jnp.bfloat16), adj,
        dimension_numbers=(((0,), (0,)), ((), ())),
        preferred_element_type=jnp.float32)

    @pl.when(i == pl.num_programs(0) - 1)
    def _finalize():
        # Fold node_norm in: anchor a (a lane of tmp^T) scaled by 1/colsum[a];
        # the (1, A_p) reciprocal sublane-broadcasts over (F_p, A_p) for free.
        recip_col = pl.reciprocal(
            jnp.maximum(colsum_acc[...], VERY_SMALL_NUMBER), approx=False)
        tmpt_ref[...] = (tmpt_acc[...] * recip_col).astype(jnp.bfloat16)


# ---------------------------------------------------------------------------
# Pass 2 (parallel over N tiles):
#   out_tile = recip_row * (adj_tile . tmp_norm)        contraction over A
# ---------------------------------------------------------------------------
def _anchor_combine_kernel(adj_ref, tmpt_ref, rrow_ref, out_ref):
    out = lax.dot_general(
        adj_ref[...], tmpt_ref[...],
        dimension_numbers=(((1,), (1,)), ((), ())),            # NT: contract A
        preferred_element_type=jnp.float32)                    # (tn, F_p)
    out_ref[...] = (out * rrow_ref[...]).astype(out_ref.dtype)


# ---------------------------------------------------------------------------
# Fused single-kernel fast path (everything resident in VMEM, adj read once).
# ---------------------------------------------------------------------------
def _anchor_fused_kernel(x_ref, adj_ref, w_ref, out_ref):
    adj = adj_ref[...]                                          # (N_p, A_p) bf16
    adj_f32 = adj.astype(jnp.float32)
    recip_col = pl.reciprocal(
        jnp.maximum(jnp.sum(adj_f32, axis=0, keepdims=True), VERY_SMALL_NUMBER),
        approx=False)                                           # (1, A_p)
    recip_row = pl.reciprocal(
        jnp.maximum(jnp.sum(adj_f32, axis=1, keepdims=True), VERY_SMALL_NUMBER),
        approx=False)                                           # (N_p, 1)

    support = jnp.dot(x_ref[...], w_ref[...],
                      preferred_element_type=jnp.float32)       # (N_p, F_p)
    tmpt = lax.dot_general(
        support.astype(jnp.bfloat16), adj,
        dimension_numbers=(((0,), (0,)), ((), ())),
        preferred_element_type=jnp.float32)                     # (F_p, A_p)
    tmpt = (tmpt * recip_col).astype(jnp.bfloat16)
    out = lax.dot_general(
        adj, tmpt,
        dimension_numbers=(((1,), (1,)), ((), ())),
        preferred_element_type=jnp.float32)                     # (N_p, F_p)
    out_ref[...] = (out * recip_row).astype(out_ref.dtype)


def anchor_gcn_forward(x, adj, weight, *, tile_n=None, force_two_pass=False):
    """AnchorGCNLayer.forward with anchor_mp=True, bias=False, batch_norm=False."""
    # TODO(synk): bias / BatchNorm1d branches (module defaults bias=False,
    # batch_norm=False) and the anchor_mp=False path are not kernelized.
    N, f_in = x.shape
    A = adj.shape[-1]
    f_out = weight.shape[-1]
    out_dtype = x.dtype
    out_bytes = jnp.dtype(out_dtype).itemsize

    # Lane-dense padding: last dims -> multiples of 128 (zero padding is exact
    # for this op; padded rows/cols are sliced off at the end).
    A_p = _round_up(A, 128)
    f_p = _round_up(f_out, 128)
    f_in_p = _round_up(f_in, 128)

    budget = _vmem_budget_bytes()

    # ---- fused single-kernel fast path ----
    if not force_two_pass and tile_n is None:
        N_f = _round_up(N, 16)
        fused_vmem = (
            2 * (N_f * f_in_p * 2 + N_f * A_p * 2 + f_in_p * f_p * 2
                 + N_f * f_p * out_bytes)                       # in/out blocks
            + N_f * A_p * 4                                     # f32 adj temp
            + N_f * f_p * 4 + f_p * A_p * 6 + N_f * 8 + A_p * 8)
        if fused_vmem <= budget // 2:
            x_p = jnp.pad(x.astype(jnp.bfloat16),
                          ((0, N_f - N), (0, f_in_p - f_in)))
            adj_p = jnp.pad(adj.astype(jnp.bfloat16),
                            ((0, N_f - N), (0, A_p - A)))
            w_p = jnp.pad(weight.astype(jnp.bfloat16),
                          ((0, f_in_p - f_in), (0, f_p - f_out)))
            out_p = pl.pallas_call(
                _anchor_fused_kernel,
                out_shape=jax.ShapeDtypeStruct((N_f, f_p), out_dtype),
                grid_spec=pltpu.PrefetchScalarGridSpec(
                    num_scalar_prefetch=0,
                    grid=(1,),
                    in_specs=[
                        pl.BlockSpec((N_f, f_in_p), lambda i: (0, 0)),
                        pl.BlockSpec((N_f, A_p), lambda i: (0, 0)),
                        pl.BlockSpec((f_in_p, f_p), lambda i: (0, 0)),
                    ],
                    out_specs=pl.BlockSpec((N_f, f_p), lambda i: (0, 0)),
                ),
                compiler_params=pltpu.CompilerParams(
                    dimension_semantics=("arbitrary",),
                    vmem_limit_bytes=budget),
                cost_estimate=pl.CostEstimate(
                    flops=2 * N_f * f_in_p * f_p + 4 * N_f * A_p * f_p,
                    transcendentals=0,
                    bytes_accessed=(N_f * f_in_p * 2 + N_f * A_p * 2
                                    + f_in_p * f_p * 2 + N_f * f_p * out_bytes)),
            )(x_p, adj_p, w_p)
            return out_p[:N, :f_out]

    # ---- two-pass tiled path (N beyond VMEM) ----
    if tile_n is None:
        tile_n = _choose_tile_n(N, A_p, f_in_p, f_p, out_bytes, budget)
    tile_n = max(16, _round_up(tile_n, 16))
    N_p = _round_up(N, tile_n)
    n_tiles = N_p // tile_n

    # Single bf16 copies (cast fused with the pad) -> half the adj HBM bytes.
    x_p = jnp.pad(x.astype(jnp.bfloat16), ((0, N_p - N), (0, f_in_p - f_in)))
    adj_p = jnp.pad(adj.astype(jnp.bfloat16), ((0, N_p - N), (0, A_p - A)))
    w_p = jnp.pad(weight.astype(jnp.bfloat16),
                  ((0, f_in_p - f_in), (0, f_p - f_out)))

    # ---- pass 1: reduce over N -> pre-normalized tmp^T (bf16), recip_row ----
    tmpt_norm, recip_row = pl.pallas_call(
        _anchor_reduce_kernel,
        out_shape=(
            jax.ShapeDtypeStruct((f_p, A_p), jnp.bfloat16),
            jax.ShapeDtypeStruct((N_p, 1), jnp.float32),
        ),
        grid_spec=pltpu.PrefetchScalarGridSpec(
            num_scalar_prefetch=0,
            grid=(n_tiles,),
            in_specs=[
                pl.BlockSpec((tile_n, f_in_p), lambda i: (i, 0)),
                pl.BlockSpec((tile_n, A_p), lambda i: (i, 0)),
                pl.BlockSpec((f_in_p, f_p), lambda i: (0, 0),
                             pipeline_mode=pl.Buffered(1)),      # W: 1 buffer
            ],
            out_specs=[
                pl.BlockSpec((f_p, A_p), lambda i: (0, 0)),      # written at last step
                pl.BlockSpec((tile_n, 1), lambda i: (i, 0)),
            ],
            scratch_shapes=[
                pltpu.VMEM((f_p, A_p), jnp.float32),             # tmp^T accumulator
                pltpu.VMEM((1, A_p), jnp.float32),               # column sums
            ],
        ),
        compiler_params=pltpu.CompilerParams(
            dimension_semantics=("arbitrary",),
            vmem_limit_bytes=budget),
        cost_estimate=pl.CostEstimate(
            flops=2 * N_p * f_in_p * f_p + 2 * N_p * A_p * f_p,
            transcendentals=0,
            bytes_accessed=(N_p * f_in_p * 2 + N_p * A_p * 2 + f_in_p * f_p * 2
                            + f_p * A_p * 2 + N_p * 4)),
    )(x_p, adj_p, w_p)
    # TODO(synk): on v7x, shard pass 1 across the two TensorCores (leading
    # "parallel" axis over A_p slices, or partial-N accumulators summed after);
    # a single "arbitrary" reduction axis pins it to one core.

    # ---- pass 2: parallel over N -> out (N_p, f_p) ----
    out_p = pl.pallas_call(
        _anchor_combine_kernel,
        out_shape=jax.ShapeDtypeStruct((N_p, f_p), out_dtype),
        grid_spec=pltpu.PrefetchScalarGridSpec(
            num_scalar_prefetch=0,
            grid=(n_tiles,),
            in_specs=[
                pl.BlockSpec((tile_n, A_p), lambda i: (i, 0)),
                pl.BlockSpec((f_p, A_p), lambda i: (0, 0),
                             pipeline_mode=pl.Buffered(1)),      # tmp^T: 1 buffer
                pl.BlockSpec((tile_n, 1), lambda i: (i, 0)),
            ],
            out_specs=pl.BlockSpec((tile_n, f_p), lambda i: (i, 0)),
        ),
        compiler_params=pltpu.CompilerParams(
            dimension_semantics=("parallel",),
            vmem_limit_bytes=budget),
        cost_estimate=pl.CostEstimate(
            flops=2 * N_p * A_p * f_p,
            transcendentals=0,
            bytes_accessed=(N_p * A_p * 2 + f_p * A_p * 2 + N_p * 4
                            + N_p * f_p * out_bytes)),
    )(adj_p, tmpt_norm, recip_row)

    return out_p[:N, :f_out]


def anchor_gcn_ref(x, adj, weight):
    # Pure-JAX f32 reference mirroring the PyTorch forward.
    support = x @ weight
    node_norm = adj / jnp.maximum(jnp.sum(adj, axis=-2, keepdims=True), VERY_SMALL_NUMBER)
    anchor_norm = adj / jnp.maximum(jnp.sum(adj, axis=-1, keepdims=True), VERY_SMALL_NUMBER)
    return anchor_norm @ (node_norm.T @ support)


def xavier_uniform(key, shape, dtype=jnp.float32):
    fan_in, fan_out = shape
    bound = math.sqrt(6.0 / (fan_in + fan_out))
    return jax.random.uniform(key, shape, dtype=dtype, minval=-bound, maxval=bound)


if __name__ == "__main__":
    # Small deterministic problem exercising A / f_in / f_out padding:
    # 192 nodes, 80 anchors, 48 -> 96 features.
    N, A, F_IN, F_OUT = 192, 80, 48, 96

    key = jax.random.PRNGKey(0)
    k_x, k_adj, k_w = jax.random.split(key, 3)

    x = jax.random.normal(k_x, (N, F_IN), dtype=jnp.float32)
    # Non-negative node-anchor adjacency (as produced by an attention/similarity step).
    adj = jax.random.uniform(k_adj, (N, A), dtype=jnp.float32)
    weight = xavier_uniform(k_w, (F_IN, F_OUT))

    ref = anchor_gcn_ref(x, adj, weight)

    # Path 1: auto dispatch -> fused single-kernel fast path at this size.
    fused_fn = jax.jit(anchor_gcn_forward)
    out_fused = jax.block_until_ready(fused_fn(x, adj, weight))

    # Path 2: forced two-pass tiled path, 3 N-tiles of 64 rows, to exercise the
    # reduce/finalize + parallel-combine pipeline.
    tiled_fn = jax.jit(functools.partial(anchor_gcn_forward,
                                         tile_n=64, force_two_pass=True))
    out_tiled = jax.block_until_ready(tiled_fn(x, adj, weight))

    for out in (out_fused, out_tiled):
        assert out.shape == (N, F_OUT)
        assert bool(jnp.all(jnp.isfinite(out)))
        # bf16 MXU operands + bf16 adj/tmp storage (f32 accumulation everywhere)
        # -> bf16-appropriate tolerance vs the f32 reference.
        assert jnp.allclose(out, ref, atol=3e-2, rtol=3e-2), "mismatch vs reference"

    print("KERNEL_OK")
</pallas_src>

<mosaic_0001>
module attributes {stable_mosaic.version = 11 : i64} {
  func.func @_anchor_fused_kernel(%arg0: i32, %arg1: memref<192x128xbf16, #tpu.memory_space<vmem>>, %arg2: memref<192x128xbf16, #tpu.memory_space<vmem>>, %arg3: memref<128x128xbf16, #tpu.memory_space<vmem>>, %arg4: memref<192x128xf32, #tpu.memory_space<vmem>>) attributes {dimension_semantics = [#tpu.dimension_semantics<arbitrary>], iteration_bounds = array<i64: 1>, scalar_prefetch = 0 : i64, scratch_operands = 0 : i64, tpu.core_type = #tpu.core_type<tc>, window_params = [{pipeline_mode = #tpu.pipeline_mode<synchronous>, transform_indices = @transform_0, window_bounds = array<i64: 192, 128>}, {pipeline_mode = #tpu.pipeline_mode<synchronous>, transform_indices = @transform_1, window_bounds = array<i64: 192, 128>}, {pipeline_mode = #tpu.pipeline_mode<synchronous>, transform_indices = @transform_2, window_bounds = array<i64: 128, 128>}, {pipeline_mode = #tpu.pipeline_mode<synchronous>, transform_indices = @transform_3, window_bounds = array<i64: 192, 128>}]} {
    %c0 = arith.constant 0 : index
    %c0_0 = arith.constant 0 : index
    %0 = vector.load %arg2[%c0, %c0_0] : memref<192x128xbf16, #tpu.memory_space<vmem>>, vector<192x128xbf16>
    %1 = arith.extf %0 : vector<192x128xbf16> to vector<192x128xf32>
    %cst = arith.constant dense<0.000000e+00> : vector<128xf32>
    %2 = vector.multi_reduction <add>, %1, %cst [0] : vector<192x128xf32> to vector<128xf32>
    %3 = vector.shape_cast %2 : vector<128xf32> to vector<1x128xf32>
    %cst_1 = arith.constant 9.99999996E-13 : f32
    %4 = vector.broadcast %cst_1 : f32 to vector<1x128xf32>
    %5 = arith.maximumf %3, %4 : vector<1x128xf32>
    %6 = tpu.reciprocal %5 : vector<1x128xf32> -> vector<1x128xf32>
    %cst_2 = arith.constant dense<0.000000e+00> : vector<192xf32>
    %7 = vector.multi_reduction <add>, %1, %cst_2 [1] : vector<192x128xf32> to vector<192xf32>
    %8 = vector.shape_cast %7 : vector<192xf32> to vector<192x1xf32>
    %cst_3 = arith.constant 9.99999996E-13 : f32
    %9 = vector.broadcast %cst_3 : f32 to vector<192x1xf32>
    %10 = arith.maximumf %8, %9 : vector<192x1xf32>
    %11 = tpu.reciprocal %10 : vector<192x1xf32> -> vector<192x1xf32>
    %c0_4 = arith.constant 0 : index
    %c0_5 = arith.constant 0 : index
    %12 = vector.load %arg1[%c0_4, %c0_5] : memref<192x128xbf16, #tpu.memory_space<vmem>>, vector<192x128xbf16>
    %c0_6 = arith.constant 0 : index
    %c0_7 = arith.constant 0 : index
    %13 = vector.load %arg3[%c0_6, %c0_7] : memref<128x128xbf16, #tpu.memory_space<vmem>>, vector<128x128xbf16>
    %cst_8 = arith.constant dense<0.000000e+00> : vector<192x128xf32>
    %14 = tpu.matmul %12, %13, %cst_8 {dimension_numbers = #tpu.dot_dimension_numbers<[1], [0], [0], [1], [0, 0, 1, 1], [], []>} : vector<192x128xbf16>, vector<128x128xbf16>, vector<192x128xf32> -> vector<192x128xf32>
    %15 = arith.truncf %14 : vector<192x128xf32> to vector<192x128xbf16>
    %cst_9 = arith.constant dense<0.000000e+00> : vector<128x128xf32>
    %16 = tpu.matmul %15, %0, %cst_9 {dimension_numbers = #tpu.dot_dimension_numbers<[0], [0], [1], [1], [0, 1, 1, 1], [], []>} : vector<192x128xbf16>, vector<192x128xbf16>, vector<128x128xf32> -> vector<128x128xf32>
    %17 = vector.broadcast %6 : vector<1x128xf32> to vector<128x128xf32>
    %18 = arith.mulf %16, %17 : vector<128x128xf32>
    %19 = arith.truncf %18 : vector<128x128xf32> to vector<128x128xbf16>
    %cst_10 = arith.constant dense<0.000000e+00> : vector<192x128xf32>
    %20 = tpu.matmul %0, %19, %cst_10 {dimension_numbers = #tpu.dot_dimension_numbers<[1], [1], [0], [0], [0, 0, 1, 0], [], []>} : vector<192x128xbf16>, vector<128x128xbf16>, vector<192x128xf32> -> vector<192x128xf32>
    %21 = vector.broadcast %11 : vector<192x1xf32> to vector<192x128xf32>
    %22 = arith.mulf %20, %21 : vector<192x128xf32>
    %c0_11 = arith.constant 0 : index
    %c0_12 = arith.constant 0 : index
    %23 = vector.load %arg4[%c0_11, %c0_12] : memref<192x128xf32, #tpu.memory_space<vmem>>, vector<192x128xf32>
    tpu.vector_store %arg4[%c0_11, %c0_12], %22 {strides = array<i32>} : memref<192x128xf32, #tpu.memory_space<vmem>>, vector<192x128xf32>,
    return
  }
  func.func @transform_0(%arg0: i32) -> (i32, i32) {
    %c0_i32 = arith.constant 0 : i32
    %c0_i32_0 = arith.constant 0 : i32
    %c0_i32_1 = arith.constant 0 : i32
    return %c0_i32, %c0_i32_0 : i32, i32
  }
  func.func @transform_1(%arg0: i32) -> (i32, i32) {
    %c0_i32 = arith.constant 0 : i32
    %c0_i32_0 = arith.constant 0 : i32
    %c0_i32_1 = arith.constant 0 : i32
    return %c0_i32, %c0_i32_0 : i32, i32
  }
  func.func @transform_2(%arg0: i32) -> (i32, i32) {
    %c0_i32 = arith.constant 0 : i32
    %c0_i32_0 = arith.constant 0 : i32
    %c0_i32_1 = arith.constant 0 : i32
    return %c0_i32, %c0_i32_0 : i32, i32
  }
  func.func @transform_3(%arg0: i32) -> (i32, i32) {
    %c0_i32 = arith.constant 0 : i32
    %c0_i32_0 = arith.constant 0 : i32
    %c0_i32_1 = arith.constant 0 : i32
    return %c0_i32, %c0_i32_0 : i32, i32
  }
}

</mosaic_0001>

<llo_original>
// kernel: anchor_gcn_forward.1
$region0: #{anchor_gcn_forward.1}
  #allocation0 [shape = 'u32[]', space=smem, size = 0x4, offset = 0x4, fixed_abs, tag = 'smem constant byte address 0x4 - core index']
  #allocation1 [shape = 'u32[72,128]{1,0:T(1,128)}', space=vmem, size = 0x9000, scoped, tag = 'internal scratch']
  %s0 = inlined_call_operand.vmem [shape: bf16[192,128], index: 0, kind: input, shape index: {}]
  %s1 = inlined_call_operand.vmem [shape: bf16[192,128], index: 1, kind: input, shape index: {}]
  %s2 = inlined_call_operand.vmem [shape: bf16[128,128], index: 2, kind: input, shape index: {}]
  %s3 = inlined_call_operand.hbm [shape: f32[192,128], index: 3, kind: output, shape index: {}]
  %s4 = sld [smem:[#allocation0]]
  $region22: #{anchor_gcn_forward.1} parent=0
    _
  %s6 = ssub.s32 1, %s4
  %s7 = scalar_select 0, %s6, %s4
  $region1: #{anchor_gcn_forward.1} parent=0
    #allocation2 [shape = 'u8[98304]{0}', space=vmem, size = 0x18000, scoped, tag = 'output window, operand 0, single buffered']
    #allocation3 [shape = 's32[1]{0}', space=sflag, size = 0x4, scoped, tag = 'scoped memory for anchor_gcn_forward.1']
    %8 = vsyncpa [#allocation3], 0
    // Predicated region
    $region2: #{anchor_gcn_forward.1} parent=1 // pred_check
      _
    $region3: #{anchor_gcn_forward.1} parent=1 // pred_check_branch
      %10 = sbr.rel (0) target = $region5
    $region4: #{anchor_gcn_forward.1} parent=1 // pred_region
      _
    $region5: #{anchor_gcn_forward.1} parent=1 // pred_fallthru
      _
    // Predicated region
    $region6: #{anchor_gcn_forward.1} parent=1 // pred_check
      _
    $region7: #{anchor_gcn_forward.1} parent=1 // pred_check_branch
      %12 = sbr.rel (0) target = $region9
    $region8: #{anchor_gcn_forward.1} parent=1 // pred_region
      _
    $region9: #{anchor_gcn_forward.1} parent=1 // pred_fallthru
      _
    // Predicated region
    $region10: #{anchor_gcn_forward.1} parent=1 // pred_check
      _
    $region11: #{anchor_gcn_forward.1} parent=1 // pred_check_branch
      %14 = sbr.rel (0) target = $region13
    $region12: #{anchor_gcn_forward.1} parent=1 // pred_region
      _
    $region13: #{anchor_gcn_forward.1} parent=1 // pred_fallthru
      _
    %v16 = vld [vmem:[%s1] sm:$0xf]
    %v17 = vld [vmem:[%s1 + $0x4] sm:$0xf]
    %v18 = vld [vmem:[%s1 + $0x8] sm:$0xf]
    %v19 = vld [vmem:[%s1 + $0xc] sm:$0xf]
    %v20 = vld [vmem:[%s1 + $0x10] sm:$0xf]
    %v21 = vld [vmem:[%s1 + $0x14] sm:$0xf]
    %v22 = vld [vmem:[%s1 + $0x18] sm:$0xf]
    %v23 = vld [vmem:[%s1 + $0x1c] sm:$0xf]
    %v24 = vld [vmem:[%s1 + $0x20] sm:$0xf]
    %v25 = vld [vmem:[%s1 + $0x24] sm:$0xf]
    %v26 = vld [vmem:[%s1 + $0x28] sm:$0xf]
    %v27 = vld [vmem:[%s1 + $0x2c] sm:$0xf]
    %v28 = vld [vmem:[%s1 + $0x30] sm:$0xf]
    %v29 = vld [vmem:[%s1 + $0x34] sm:$0xf]
    %v30 = vld [vmem:[%s1 + $0x38] sm:$0xf]
    %v31 = vld [vmem:[%s1 + $0x3c] sm:$0xf]
    %v32 = vld [vmem:[%s1 + $0x40] sm:$0xf]
    %v33 = vld [vmem:[%s1 + $0x44] sm:$0xf]
    %v34 = vld [vmem:[%s1 + $0x48] sm:$0xf]
    %v35 = vld [vmem:[%s1 + $0x4c] sm:$0xf]
    %v36 = vld [vmem:[%s1 + $0x50] sm:$0xf]
    %v37 = vld [vmem:[%s1 + $0x54] sm:$0xf]
    %v38 = vld [vmem:[%s1 + $0x58] sm:$0xf]
    %v39 = vld [vmem:[%s1 + $0x5c] sm:$0xf]
    %v40 = vunpack.c.l.bf16 %v16
    %v41 = vunpack.c.l.bf16 %v17
    %v42 = vunpack.c.l.bf16 %v18
    %v43 = vunpack.c.l.bf16 %v19
    %v44 = vunpack.c.l.bf16 %v20
    %v45 = vunpack.c.l.bf16 %v21
    %v46 = vunpack.c.l.bf16 %v22
    %v47 = vunpack.c.l.bf16 %v23
    %v48 = vunpack.c.l.bf16 %v24
    %v49 = vunpack.c.l.bf16 %v25
    %v50 = vunpack.c.l.bf16 %v26
    %v51 = vunpack.c.l.bf16 %v27
    %v52 = vunpack.c.l.bf16 %v28
    %v53 = vunpack.c.l.bf16 %v29
    %v54 = vunpack.c.l.bf16 %v30
    %v55 = vunpack.c.l.bf16 %v31
    %v56 = vunpack.c.l.bf16 %v32
    %v57 = vunpack.c.l.bf16 %v33
    %v58 = vunpack.c.l.bf16 %v34
    %v59 = vunpack.c.l.bf16 %v35
    %v60 = vunpack.c.l.bf16 %v36
    %v61 = vunpack.c.l.bf16 %v37
    %v62 = vunpack.c.l.bf16 %v38
    %v63 = vunpack.c.l.bf16 %v39
    %v64 = vadd.f32 %v40, %v41
    %v65 = vadd.f32 %v64, %v42
    %v66 = vadd.f32 %v65, %v43
    %v67 = vadd.f32 %v66, %v44
    %v68 = vadd.f32 %v67, %v45
    %v69 = vadd.f32 %v68, %v46
    %v70 = vadd.f32 %v69, %v47
    %v71 = vadd.f32 %v70, %v48
    %v72 = vadd.f32 %v71, %v49
    %v73 = vadd.f32 %v72, %v50
    %v74 = vadd.f32 %v73, %v51
    %v75 = vadd.f32 %v74, %v52
    %v76 = vadd.f32 %v75, %v53
    %v77 = vadd.f32 %v76, %v54
    %v78 = vadd.f32 %v77, %v55
    %v79 = vadd.f32 %v78, %v56
    %v80 = vadd.f32 %v79, %v57
    %v81 = vadd.f32 %v80, %v58
    %v82 = vadd.f32 %v81, %v59
    %v83 = vadd.f32 %v82, %v60
    %v84 = vadd.f32 %v83, %v61
    %v85 = vadd.f32 %v84, %v62
    %v86 = vadd.f32 %v85, %v63
    %v87 = vrot.slane %v86, 4
    %v88 = vadd.f32 %v86, %v87
    %v89 = vrot.slane %v88, 2
    %v90 = vadd.f32 %v88, %v89
    %v91 = vrot.slane %v90, 1
    %v92 = vadd.f32 %v90, %v91
    %v93 = vmax.f32 %v92, 1e-12
    %v94 = vrcp.pop %v93
    %v95 = vmul.f32 %v93, %v94
    %v96 = vsub.f32 1.0, %v95
    %v97 = vmul.f32 %v94, %v96
    %v98 = vadd.f32 %v94, %v97
    %vm99 = vweird.f32 %v93
    %vm100 = vweird.f32 %v94
    %vm101 = vmor %vm99, %vm100
    %v102 = vsel %vm101, %v94, %v98
    %v103 = vand.u32 2147483647, %v93
    %vm104 = vcmp.eq.f32.partialorder %v103, 8.507059e+37
    %v105 = vand.u32 %v93, 2147483648
    %v106 = vor.u32 1.1754944e-38, %v105
    %v107 = vsel %vm104, %v106, %v102
    %108 = vadd.xlane.f32.xlu0 %v40
    %v109 = vpop.xlane.xlu0 %108
    %110 = vadd.xlane.f32.xlu0 %v41
    %v111 = vpop.xlane.xlu0 %110
    %112 = vadd.xlane.f32.xlu0 %v42
    %v113 = vpop.xlane.xlu0 %112
    %114 = vadd.xlane.f32.xlu0 %v43
    %v115 = vpop.xlane.xlu0 %114
    %116 = vadd.xlane.f32.xlu0 %v44
    %v117 = vpop.xlane.xlu0 %116
    %118 = vadd.xlane.f32.xlu0 %v45
    %v119 = vpop.xlane.xlu0 %118
    %120 = vadd.xlane.f32.xlu0 %v46
    %v121 = vpop.xlane.xlu0 %120
    %122 = vadd.xlane.f32.xlu0 %v47
    %v123 = vpop.xlane.xlu0 %122
    %124 = vadd.xlane.f32.xlu0 %v48
    %v125 = vpop.xlane.xlu0 %124
    %126 = vadd.xlane.f32.xlu0 %v49
    %v127 = vpop.xlane.xlu0 %126
    %128 = vadd.xlane.f32.xlu0 %v50
    %v129 = vpop.xlane.xlu0 %128
    %130 = vadd.xlane.f32.xlu0 %v51
    %v131 = vpop.xlane.xlu0 %130
    %132 = vadd.xlane.f32.xlu0 %v52
    %v133 = vpop.xlane.xlu0 %132
    %134 = vadd.xlane.f32.xlu0 %v53
    %v135 = vpop.xlane.xlu0 %134
    %136 = vadd.xlane.f32.xlu0 %v54
    %v137 = vpop.xlane.xlu0 %136
    %138 = vadd.xlane.f32.xlu0 %v55
    %v139 = vpop.xlane.xlu0 %138
    %140 = vadd.xlane.f32.xlu0 %v56
    %v141 = vpop.xlane.xlu0 %140
    %142 = vadd.xlane.f32.xlu0 %v57
    %v143 = vpop.xlane.xlu0 %142
    %144 = vadd.xlane.f32.xlu0 %v58
    %v145 = vpop.xlane.xlu0 %144
    %146 = vadd.xlane.f32.xlu0 %v59
    %v147 = vpop.xlane.xlu0 %146
    %148 = vadd.xlane.f32.xlu0 %v60
    %v149 = vpop.xlane.xlu0 %148
    %150 = vadd.xlane.f32.xlu0 %v61
    %v151 = vpop.xlane.xlu0 %150
    %152 = vadd.xlane.f32.xlu0 %v62
    %v153 = vpop.xlane.xlu0 %152
    %154 = vadd.xlane.f32.xlu0 %v63
    %v155 = vpop.xlane.xlu0 %154
    %v156 = vmax.f32 %v109, 1e-12
    %v157 = vmax.f32 %v111, 1e-12
    %v158 = vmax.f32 %v113, 1e-12
    %v159 = vmax.f32 %v115, 1e-12
    %v160 = vmax.f32 %v117, 1e-12
    %v161 = vmax.f32 %v119, 1e-12
    %v162 = vmax.f32 %v121, 1e-12
    %v163 = vmax.f32 %v123, 1e-12
    %v164 = vmax.f32 %v125, 1e-12
    %v165 = vmax.f32 %v127, 1e-12
    %v166 = vmax.f32 %v129, 1e-12
    %v167 = vmax.f32 %v131, 1e-12
    %v168 = vmax.f32 %v133, 1e-12
    %v169 = vmax.f32 %v135, 1e-12
    %v170 = vmax.f32 %v137, 1e-12
    %v171 = vmax.f32 %v139, 1e-12
    %v172 = vmax.f32 %v141, 1e-12
    %v173 = vmax.f32 %v143, 1e-12
    %v174 = vmax.f32 %v145, 1e-12
    %v175 = vmax.f32 %v147, 1e-12
    %v176 = vmax.f32 %v149, 1e-12
    %v177 = vmax.f32 %v151, 1e-12
    %v178 = vmax.f32 %v153, 1e-12
    %v179 = vmax.f32 %v155, 1e-12
    %v180 = vrcp.pop %v156
    %v181 = vmul.f32 %v156, %v180
    %v182 = vsub.f32 1.0, %v181
    %v183 = vmul.f32 %v180, %v182
    %v184 = vadd.f32 %v180, %v183
    %vm185 = vweird.f32 %v156
    %vm186 = vweird.f32 %v180
    %vm187 = vmor %vm185, %vm186
    %v188 = vsel %vm187, %v180, %v184
    %v189 = vand.u32 2147483647, %v156
    %vm190 = vcmp.eq.f32.partialorder %v189, 8.507059e+37
    %v191 = vand.u32 %v156, 2147483648
    %v192 = vor.u32 1.1754944e-38, %v191
    %v193 = vsel %vm190, %v192, %v188
    %v194 = vrcp.pop %v157
    %v195 = vmul.f32 %v157, %v194
    %v196 = vsub.f32 1.0, %v195
    %v197 = vmul.f32 %v194, %v196
    %v198 = vadd.f32 %v194, %v197
    %vm199 = vweird.f32 %v157
    %vm200 = vweird.f32 %v194
    %vm201 = vmor %vm199, %vm200
    %v202 = vsel %vm201, %v194, %v198
    %v203 = vand.u32 2147483647, %v157
    %vm204 = vcmp.eq.f32.partialorder %v203, 8.507059e+37
    %v205 = vand.u32 %v157, 2147483648
    %v206 = vor.u32 1.1754944e-38, %v205
    %v207 = vsel %vm204, %v206, %v202
    %v208 = vrcp.pop %v158
    %v209 = vmul.f32 %v158, %v208
    %v210 = vsub.f32 1.0, %v209
    %v211 = vmul.f32 %v208, %v210
    %v212 = vadd.f32 %v208, %v211
    %vm213 = vweird.f32 %v158
    %vm214 = vweird.f32 %v208
    %vm215 = vmor %vm213, %vm214
    %v216 = vsel %vm215, %v208, %v212
    %v217 = vand.u32 2147483647, %v158
    %vm218 = vcmp.eq.f32.partialorder %v217, 8.507059e+37
    %v219 = vand.u32 %v158, 2147483648
    %v220 = vor.u32 1.1754944e-38, %v219
    %v221 = vsel %vm218, %v220, %v216
    %v222 = vrcp.pop %v159
    %v223 = vmul.f32 %v159, %v222
    %v224 = vsub.f32 1.0, %v223
    %v225 = vmul.f32 %v222, %v224
    %v226 = vadd.f32 %v222, %v225
    %vm227 = vweird.f32 %v159
    %vm228 = vweird.f32 %v222
    %vm229 = vmor %vm227, %vm228
    %v230 = vsel %vm229, %v222, %v226
    %v231 = vand.u32 2147483647, %v159
    %vm232 = vcmp.eq.f32.partialorder %v231, 8.507059e+37
    %v233 = vand.u32 %v159, 2147483648
    %v234 = vor.u32 1.1754944e-38, %v233
    %v235 = vsel %vm232, %v234, %v230
    %v236 = vrcp.pop %v160
    %v237 = vmul.f32 %v160, %v236
    %v238 = vsub.f32 1.0, %v237
    %v239 = vmul.f32 %v236, %v238
    %v240 = vadd.f32 %v236, %v239
    %vm241 = vweird.f32 %v160
    %vm242 = vweird.f32 %v236
    %vm243 = vmor %vm241, %vm242
    %v244 = vsel %vm243, %v236, %v240
    %v245 = vand.u32 2147483647, %v160
    %vm246 = vcmp.eq.f32.partialorder %v245, 8.507059e+37
    %v247 = vand.u32 %v160, 2147483648
    %v248 = vor.u32 1.1754944e-38, %v247
    %v249 = vsel %vm246, %v248, %v244
    %v250 = vrcp.pop %v161
    %v251 = vmul.f32 %v161, %v250
    %v252 = vsub.f32 1.0, %v251
    %v253 = vmul.f32 %v250, %v252
    %v254 = vadd.f32 %v250, %v253
    %vm255 = vweird.f32 %v161
    %vm256 = vweird.f32 %v250
    %vm257 = vmor %vm255, %vm256
    %v258 = vsel %vm257, %v250, %v254
    %v259 = vand.u32 2147483647, %v161
    %vm260 = vcmp.eq.f32.partialorder %v259, 8.507059e+37
    %v261 = vand.u32 %v161, 2147483648
    %v262 = vor.u32 1.1754944e-38, %v261
    %v263 = vsel %vm260, %v262, %v258
    %v264 = vrcp.pop %v162
    %v265 = vmul.f32 %v162, %v264
    %v266 = vsub.f32 1.0, %v265
    %v267 = vmul.f32 %v264, %v266
    %v268 = vadd.f32 %v264, %v267
    %vm269 = vweird.f32 %v162
    %vm270 = vweird.f32 %v264
    %vm271 = vmor %vm269, %vm270
    %v272 = vsel %vm271, %v264, %v268
    %v273 = vand.u32 2147483647, %v162
    %vm274 = vcmp.eq.f32.partialorder %v273, 8.507059e+37
    %v275 = vand.u32 %v162, 2147483648
    %v276 = vor.u32 1.1754944e-38, %v275
    %v277 = vsel %vm274, %v276, %v272
    %v278 = vrcp.pop %v163
    %v279 = vmul.f32 %v163, %v278
    %v280 = vsub.f32 1.0, %v279
    %v281 = vmul.f32 %v278, %v280
    %v282 = vadd.f32 %v278, %v281
    %vm283 = vweird.f32 %v163
    %vm284 = vweird.f32 %v278
    %vm285 = vmor %vm283, %vm284
    %v286 = vsel %vm285, %v278, %v282
    %v287 = vand.u32 2147483647, %v163
    %vm288 = vcmp.eq.f32.partialorder %v287, 8.507059e+37
    %v289 = vand.u32 %v163, 2147483648
    %v290 = vor.u32 1.1754944e-38, %v289
    %v291 = vsel %vm288, %v290, %v286
    %v292 = vrcp.pop %v164
    %v293 = vmul.f32 %v164, %v292
    %v294 = vsub.f32 1.0, %v293
    %v295 = vmul.f32 %v292, %v294
    %v296 = vadd.f32 %v292, %v295
    %vm297 = vweird.f32 %v164
    %vm298 = vweird.f32 %v292
    %vm299 = vmor %vm297, %vm298
    %v300 = vsel %vm299, %v292, %v296
    %v301 = vand.u32 2147483647, %v164
    %vm302 = vcmp.eq.f32.partialorder %v301, 8.507059e+37
    %v303 = vand.u32 %v164, 2147483648
    %v304 = vor.u32 1.1754944e-38, %v303
    %v305 = vsel %vm302, %v304, %v300
    %v306 = vrcp.pop %v165
    %v307 = vmul.f32 %v165, %v306
    %v308 = vsub.f32 1.0, %v307
    %v309 = vmul.f32 %v306, %v308
    %v310 = vadd.f32 %v306, %v309
    %vm311 = vweird.f32 %v165
    %vm312 = vweird.f32 %v306
    %vm313 = vmor %vm311, %vm312
    %v314 = vsel %vm313, %v306, %v310
    %v315 = vand.u32 2147483647, %v165
    %vm316 = vcmp.eq.f32.partialorder %v315, 8.507059e+37
    %v317 = vand.u32 %v165, 2147483648
    %v318 = vor.u32 1.1754944e-38, %v317
    %v319 = vsel %vm316, %v318, %v314
    %v320 = vrcp.pop %v166
    %v321 = vmul.f32 %v166, %v320
    %v322 = vsub.f32 1.0, %v321
    %v323 = vmul.f32 %v320, %v322
    %v324 = vadd.f32 %v320, %v323
    %vm325 = vweird.f32 %v166
    %vm326 = vweird.f32 %v320
    %vm327 = vmor %vm325, %vm326
    %v328 = vsel %vm327, %v320, %v324
    %v329 = vand.u32 2147483647, %v166
    %vm330 = vcmp.eq.f32.partialorder %v329, 8.507059e+37
    %v331 = vand.u32 %v166, 2147483648
    %v332 = vor.u32 1.1754944e-38, %v331
    %v333 = vsel %vm330, %v332, %v328
    %v334 = vrcp.pop %v167
    %v335 = vmul.f32 %v167, %v334
    %v336 = vsub.f32 1.0, %v335
    %v337 = vmul.f32 %v334, %v336
    %v338 = vadd.f32 %v334, %v337
    %vm339 = vweird.f32 %v167
    %vm340 = vweird.f32 %v334
    %vm341 = vmor %vm339, %vm340
    %v342 = vsel %vm341, %v334, %v338
    %v343 = vand.u32 2147483647, %v167
    %vm344 = vcmp.eq.f32.partialorder %v343, 8.507059e+37
    %v345 = vand.u32 %v167, 2147483648
    %v346 = vor.u32 1.1754944e-38, %v345
    %v347 = vsel %vm344, %v346, %v342
    %v348 = vrcp.pop %v168
    %v349 = vmul.f32 %v168, %v348
    %v350 = vsub.f32 1.0, %v349
    %v351 = vmul.f32 %v348, %v350
    %v352 = vadd.f32 %v348, %v351
    %vm353 = vweird.f32 %v168
    %vm354 = vweird.f32 %v348
    %vm355 = vmor %vm353, %vm354
    %v356 = vsel %vm355, %v348, %v352
    %v357 = vand.u32 2147483647, %v168
    %vm358 = vcmp.eq.f32.partialorder %v357, 8.507059e+37
    %v359 = vand.u32 %v168, 2147483648
    %v360 = vor.u32 1.1754944e-38, %v359
    %v361 = vsel %vm358, %v360, %v356
    %v362 = vrcp.pop %v169
    %v363 = vmul.f32 %v169, %v362
    %v364 = vsub.f32 1.0, %v363
    %v365 = vmul.f32 %v362, %v364
    %v366 = vadd.f32 %v362, %v365
    %vm367 = vweird.f32 %v169
    %vm368 = vweird.f32 %v362
    %vm369 = vmor %vm367, %vm368
    %v370 = vsel %vm369, %v362, %v366
    %v371 = vand.u32 2147483647, %v169
    %vm372 = vcmp.eq.f32.partialorder %v371, 8.507059e+37
    %v373 = vand.u32 %v169, 2147483648
    %v374 = vor.u32 1.1754944e-38, %v373
    %v375 = vsel %vm372, %v374, %v370
    %v376 = vrcp.pop %v170
    %v377 = vmul.f32 %v170, %v376
    %v378 = vsub.f32 1.0, %v377
    %v379 = vmul.f32 %v376, %v378
    %v380 = vadd.f32 %v376, %v379
    %vm381 = vweird.f32 %v170
    %vm382 = vweird.f32 %v376
    %vm383 = vmor %vm381, %vm382
    %v384 = vsel %vm383, %v376, %v380
    %v385 = vand.u32 2147483647, %v170
    %vm386 = vcmp.eq.f32.partialorder %v385, 8.507059e+37
    %v387 = vand.u32 %v170, 2147483648
    %v388 = vor.u32 1.1754944e-38, %v387
    %v389 = vsel %vm386, %v388, %v384
    %v390 = vrcp.pop %v171
    %v391 = vmul.f32 %v171, %v390
    %v392 = vsub.f32 1.0, %v391
    %v393 = vmul.f32 %v390, %v392
    %v394 = vadd.f32 %v390, %v393
    %vm395 = vweird.f32 %v171
    %vm396 = vweird.f32 %v390
    %vm397 = vmor %vm395, %vm396
    %v398 = vsel %vm397, %v390, %v394
    %v399 = vand.u32 2147483647, %v171
    %vm400 = vcmp.eq.f32.partialorder %v399, 8.507059e+37
    %v401 = vand.u32 %v171, 2147483648
    %v402 = vor.u32 1.1754944e-38, %v401
    %v403 = vsel %vm400, %v402, %v398
    %v404 = vrcp.pop %v172
    %v405 = vmul.f32 %v172, %v404
    %v406 = vsub.f32 1.0, %v405
    %v407 = vmul.f32 %v404, %v406
    %v408 = vadd.f32 %v404, %v407
    %vm409 = vweird.f32 %v172
    %vm410 = vweird.f32 %v404
    %vm411 = vmor %vm409, %vm410
    %v412 = vsel %vm411, %v404, %v408
    %v413 = vand.u32 2147483647, %v172
    %vm414 = vcmp.eq.f32.partialorder %v413, 8.507059e+37
    %v415 = vand.u32 %v172, 2147483648
    %v416 = vor.u32 1.1754944e-38, %v415
    %v417 = vsel %vm414, %v416, %v412
    %v418 = vrcp.pop %v173
    %v419 = vmul.f32 %v173, %v418
    %v420 = vsub.f32 1.0, %v419
    %v421 = vmul.f32 %v418, %v420
    %v422 = vadd.f32 %v418, %v421
    %vm423 = vweird.f32 %v173
    %vm424 = vweird.f32 %v418
    %vm425 = vmor %vm423, %vm424
    %v426 = vsel %vm425, %v418, %v422
    %v427 = vand.u32 2147483647, %v173
    %vm428 = vcmp.eq.f32.partialorder %v427, 8.507059e+37
    %v429 = vand.u32 %v173, 2147483648
    %v430 = vor.u32 1.1754944e-38, %v429
    %v431 = vsel %vm428, %v430, %v426
    %v432 = vrcp.pop %v174
    %v433 = vmul.f32 %v174, %v432
    %v434 = vsub.f32 1.0, %v433
    %v435 = vmul.f32 %v432, %v434
    %v436 = vadd.f32 %v432, %v435
    %vm437 = vweird.f32 %v174
    %vm438 = vweird.f32 %v432
    %vm439 = vmor %vm437, %vm438
    %v440 = vsel %vm439, %v432, %v436
    %v441 = vand.u32 2147483647, %v174
    %vm442 = vcmp.eq.f32.partialorder %v441, 8.507059e+37
    %v443 = vand.u32 %v174, 2147483648
    %v444 = vor.u32 1.1754944e-38, %v443
    %v445 = vsel %vm442, %v444, %v440
    %v446 = vrcp.pop %v175
    %v447 = vmul.f32 %v175, %v446
    %v448 = vsub.f32 1.0, %v447
    %v449 = vmul.f32 %v446, %v448
    %v450 = vadd.f32 %v446, %v449
    %vm451 = vweird.f32 %v175
    %vm452 = vweird.f32 %v446
    %vm453 = vmor %vm451, %vm452
    %v454 = vsel %vm453, %v446, %v450
    %v455 = vand.u32 2147483647, %v175
    %vm456 = vcmp.eq.f32.partialorder %v455, 8.507059e+37
    %v457 = vand.u32 %v175, 2147483648
    %v458 = vor.u32 1.1754944e-38, %v457
    %v459 = vsel %vm456, %v458, %v454
    %v460 = vrcp.pop %v176
    %v461 = vmul.f32 %v176, %v460
    %v462 = vsub.f32 1.0, %v461
    %v463 = vmul.f32 %v460, %v462
    %v464 = vadd.f32 %v460, %v463
    %vm465 = vweird.f32 %v176
    %vm466 = vweird.f32 %v460
    %vm467 = vmor %vm465, %vm466
    %v468 = vsel %vm467, %v460, %v464
    %v469 = vand.u32 2147483647, %v176
    %vm470 = vcmp.eq.f32.partialorder %v469, 8.507059e+37
    %v471 = vand.u32 %v176, 2147483648
    %v472 = vor.u32 1.1754944e-38, %v471
    %v473 = vsel %vm470, %v472, %v468
    %v474 = vrcp.pop %v177
    %v475 = vmul.f32 %v177, %v474
    %v476 = vsub.f32 1.0, %v475
    %v477 = vmul.f32 %v474, %v476
    %v478 = vadd.f32 %v474, %v477
    %vm479 = vweird.f32 %v177
    %vm480 = vweird.f32 %v474
    %vm481 = vmor %vm479, %vm480
    %v482 = vsel %vm481, %v474, %v478
    %v483 = vand.u32 2147483647, %v177
    %vm484 = vcmp.eq.f32.partialorder %v483, 8.507059e+37
    %v485 = vand.u32 %v177, 2147483648
    %v486 = vor.u32 1.1754944e-38, %v485
    %v487 = vsel %vm484, %v486, %v482
    %v488 = vrcp.pop %v178
    %v489 = vmul.f32 %v178, %v488
    %v490 = vsub.f32 1.0, %v489
    %v491 = vmul.f32 %v488, %v490
    %v492 = vadd.f32 %v488, %v491
    %vm493 = vweird.f32 %v178
    %vm494 = vweird.f32 %v488
    %vm495 = vmor %vm493, %vm494
    %v496 = vsel %vm495, %v488, %v492
    %v497 = vand.u32 2147483647, %v178
    %vm498 = vcmp.eq.f32.partialorder %v497, 8.507059e+37
    %v499 = vand.u32 %v178, 2147483648
    %v500 = vor.u32 1.1754944e-38, %v499
    %v501 = vsel %vm498, %v500, %v496
    %v502 = vrcp.pop %v179
    %v503 = vmul.f32 %v179, %v502
    %v504 = vsub.f32 1.0, %v503
    %v505 = vmul.f32 %v502, %v504
    %v506 = vadd.f32 %v502, %v505
    %vm507 = vweird.f32 %v179
    %vm508 = vweird.f32 %v502
    %vm509 = vmor %vm507, %vm508
    %v510 = vsel %vm509, %v502, %v506
    %v511 = vand.u32 2147483647, %v179
    %vm512 = vcmp.eq.f32.partialorder %v511, 8.507059e+37
    %v513 = vand.u32 %v179, 2147483648
    %v514 = vor.u32 1.1754944e-38, %v513
    %v515 = vsel %vm512, %v514, %v510
    %v516 = vld [vmem:[%s0] sm:$0xf]
    %v517 = vld [vmem:[%s0 + $0x4] sm:$0xf]
    %v518 = vld [vmem:[%s0 + $0x8] sm:$0xf]
    %v519 = vld [vmem:[%s0 + $0xc] sm:$0xf]
    %v520 = vld [vmem:[%s0 + $0x10] sm:$0xf]
    %v521 = vld [vmem:[%s0 + $0x14] sm:$0xf]
    %v522 = vld [vmem:[%s0 + $0x18] sm:$0xf]
    %v523 = vld [vmem:[%s0 + $0x1c] sm:$0xf]
    %v524 = vld [vmem:[%s0 + $0x20] sm:$0xf]
    %v525 = vld [vmem:[%s0 + $0x24] sm:$0xf]
    %v526 = vld [vmem:[%s0 + $0x28] sm:$0xf]
    %v527 = vld [vmem:[%s0 + $0x2c] sm:$0xf]
    %v528 = vld [vmem:[%s0 + $0x30] sm:$0xf]
    %v529 = vld [vmem:[%s0 + $0x34] sm:$0xf]
    %v530 = vld [vmem:[%s0 + $0x38] sm:$0xf]
    %v531 = vld [vmem:[%s0 + $0x3c] sm:$0xf]
    %v532 = vld [vmem:[%s0 + $0x40] sm:$0xf]
    %v533 = vld [vmem:[%s0 + $0x44] sm:$0xf]
    %v534 = vld [vmem:[%s0 + $0x48] sm:$0xf]
    %v535 = vld [vmem:[%s0 + $0x4c] sm:$0xf]
    %v536 = vld [vmem:[%s0 + $0x50] sm:$0xf]
    %v537 = vld [vmem:[%s0 + $0x54] sm:$0xf]
    %v538 = vld [vmem:[%s0 + $0x58] sm:$0xf]
    %v539 = vld [vmem:[%s0 + $0x5c] sm:$0xf]
    %v540 = vld [vmem:[%s2] sm:$0xf]
    %v541 = vld [vmem:[%s2 + $0x4] sm:$0xf]
    %v542 = vld [vmem:[%s2 + $0x8] sm:$0xf]
    %v543 = vld [vmem:[%s2 + $0xc] sm:$0xf]
    %v544 = vld [vmem:[%s2 + $0x10] sm:$0xf]
    %v545 = vld [vmem:[%s2 + $0x14] sm:$0xf]
    %v546 = vld [vmem:[%s2 + $0x18] sm:$0xf]
    %v547 = vld [vmem:[%s2 + $0x1c] sm:$0xf]
    %v548 = vld [vmem:[%s2 + $0x20] sm:$0xf]
    %v549 = vld [vmem:[%s2 + $0x24] sm:$0xf]
    %v550 = vld [vmem:[%s2 + $0x28] sm:$0xf]
    %v551 = vld [vmem:[%s2 + $0x2c] sm:$0xf]
    %v552 = vld [vmem:[%s2 + $0x30] sm:$0xf]
    %v553 = vld [vmem:[%s2 + $0x34] sm:$0xf]
    %v554 = vld [vmem:[%s2 + $0x38] sm:$0xf]
    %v555 = vld [vmem:[%s2 + $0x3c] sm:$0xf]
    %v580 = vunpack.c.l.b16 %v516
    %v581 = vunpack.c.l.b16 %v517
    %v582 = vunpack.c.l.b16 %v518
    %v583 = vunpack.c.l.b16 %v519
    %v584 = vunpack.c.l.b16 %v520
    %v585 = vunpack.c.l.b16 %v521
    %v586 = vunpack.c.l.b16 %v522
    %v587 = vunpack.c.l.b16 %v523
    %v588 = vunpack.c.l.b16 %v524
    %v589 = vunpack.c.l.b16 %v525
    %v590 = vunpack.c.l.b16 %v526
    %v591 = vunpack.c.l.b16 %v527
    %v592 = vunpack.c.l.b16 %v528
    %v593 = vunpack.c.l.b16 %v529
    %v594 = vunpack.c.l.b16 %v530
    %v595 = vunpack.c.l.b16 %v531
    %v596 = vunpack.c.l.b16 %v532
    %v597 = vunpack.c.l.b16 %v533
    %v598 = vunpack.c.l.b16 %v534
    %v599 = vunpack.c.l.b16 %v535
    %v600 = vunpack.c.l.b16 %v536
    %v601 = vunpack.c.l.b16 %v537
    %v602 = vunpack.c.l.b16 %v538
    %v603 = vunpack.c.l.b16 %v539
    %v604 = vpack.c.b16 %v581, %v580
    %v605 = vpack.c.b16 %v583, %v582
    %v606 = vpack.c.b16 %v585, %v584
    %v607 = vpack.c.b16 %v587, %v586
    %v608 = vpack.c.b16 %v589, %v588
    %v609 = vpack.c.b16 %v591, %v590
    %v610 = vpack.c.b16 %v593, %v592
    %v611 = vpack.c.b16 %v595, %v594
    %v612 = vpack.c.b16 %v597, %v596
    %v613 = vpack.c.b16 %v599, %v598
    %v614 = vpack.c.b16 %v601, %v600
    %v615 = vpack.c.b16 %v603, %v602
    %v644 = vunpack.c.l.b16 %v540
    %v645 = vunpack.c.l.b16 %v541
    %v646 = vunpack.c.l.b16 %v542
    %v647 = vunpack.c.l.b16 %v543
    %v648 = vunpack.c.l.b16 %v544
    %v649 = vunpack.c.l.b16 %v545
    %v650 = vunpack.c.l.b16 %v546
    %v651 = vunpack.c.l.b16 %v547
    %v652 = vunpack.c.l.b16 %v548
    %v653 = vunpack.c.l.b16 %v549
    %v654 = vunpack.c.l.b16 %v550
    %v655 = vunpack.c.l.b16 %v551
    %v656 = vunpack.c.l.b16 %v552
    %v657 = vunpack.c.l.b16 %v553
    %v658 = vunpack.c.l.b16 %v554
    %v659 = vunpack.c.l.b16 %v555
    %v660 = vpack.c.b16 %v645, %v644
    %v661 = vpack.c.b16 %v647, %v646
    %v662 = vpack.c.b16 %v649, %v648
    %v663 = vpack.c.b16 %v651, %v650
    %v664 = vpack.c.b16 %v653, %v652
    %v665 = vpack.c.b16 %v655, %v654
    %v666 = vpack.c.b16 %v657, %v656
    %v667 = vpack.c.b16 %v659, %v658
    %676 = vmatpush.bf16.msra.mxu0 %v667
    %677 = vmatpush.bf16.msra.mxu0 %v666
    %678 = vmatpush.bf16.msra.mxu0 %v665
    %679 = vmatpush.bf16.msra.mxu0 %v664
    %680 = vmatpush.bf16.msra.mxu0 %v663
    %681 = vmatpush.bf16.msra.mxu0 %v662
    %682 = vmatpush.bf16.msra.mxu0 %v661
    %683 = vmatpush.bf16.msra.mxu0 %v660
    %684 = vmatmul.bf16.gmra.mxu0 %v604
    %v685 = vpop.f32.mrf.mxu0
    %v686 = vadd.f32 0.0, %v685
    %v687 = vpop.f32.mrf.mxu0
    %v688 = vadd.f32 0.0, %v687
    %689 = vmatmul.bf16.gmra.mxu0 %v605
    %v690 = vpop.f32.mrf.mxu0
    %v691 = vadd.f32 0.0, %v690
    %v692 = vpop.f32.mrf.mxu0
    %v693 = vadd.f32 0.0, %v692
    %694 = vmatmul.bf16.gmra.mxu0 %v606
    %v695 = vpop.f32.mrf.mxu0
    %v696 = vadd.f32 0.0, %v695
    %v697 = vpop.f32.mrf.mxu0
    %v698 = vadd.f32 0.0, %v697
    %699 = vmatmul.bf16.gmra.mxu0 %v607
    %v700 = vpop.f32.mrf.mxu0
    %v701 = vadd.f32 0.0, %v700
    %v702 = vpop.f32.mrf.mxu0
    %v703 = vadd.f32 0.0, %v702
    %704 = vmatmul.bf16.gmra.mxu0 %v608
    %v705 = vpop.f32.mrf.mxu0
    %v706 = vadd.f32 0.0, %v705
    %v707 = vpop.f32.mrf.mxu0
    %v708 = vadd.f32 0.0, %v707
    %709 = vmatmul.bf16.gmra.mxu0 %v609
    %v710 = vpop.f32.mrf.mxu0
    %v711 = vadd.f32 0.0, %v710
    %v712 = vpop.f32.mrf.mxu0
    %v713 = vadd.f32 0.0, %v712
    %714 = vmatmul.bf16.gmra.mxu0 %v610
    %v715 = vpop.f32.mrf.mxu0
    %v716 = vadd.f32 0.0, %v715
    %v717 = vpop.f32.mrf.mxu0
    %v718 = vadd.f32 0.0, %v717
    %719 = vmatmul.bf16.gmra.mxu0 %v611
    %v720 = vpop.f32.mrf.mxu0
    %v721 = vadd.f32 0.0, %v720
    %v722 = vpop.f32.mrf.mxu0
    %v723 = vadd.f32 0.0, %v722
    %724 = vmatmul.bf16.gmra.mxu0 %v612
    %v725 = vpop.f32.mrf.mxu0
    %v726 = vadd.f32 0.0, %v725
    %v727 = vpop.f32.mrf.mxu0
    %v728 = vadd.f32 0.0, %v727
    %729 = vmatmul.bf16.gmra.mxu0 %v613
    %v730 = vpop.f32.mrf.mxu0
    %v731 = vadd.f32 0.0, %v730
    %v732 = vpop.f32.mrf.mxu0
    %v733 = vadd.f32 0.0, %v732
    %734 = vmatmul.bf16.gmra.mxu0 %v614
    %v735 = vpop.f32.mrf.mxu0
    %v736 = vadd.f32 0.0, %v735
    %v737 = vpop.f32.mrf.mxu0
    %v738 = vadd.f32 0.0, %v737
    %739 = vmatmul.bf16.gmra.mxu0 %v615
    %v740 = vpop.f32.mrf.mxu0
    %v741 = vadd.f32 0.0, %v740
    %v742 = vpop.f32.mrf.mxu0
    %v743 = vadd.f32 0.0, %v742
    %744 = vdwg.mxu0
    %v745 = vpack.c.bf16 %v688, %v686
    %v746 = vpack.c.bf16 %v693, %v691
    %v747 = vpack.c.bf16 %v698, %v696
    %v748 = vpack.c.bf16 %v703, %v701
    %v749 = vpack.c.bf16 %v708, %v706
    %v750 = vpack.c.bf16 %v713, %v711
    %v751 = vpack.c.bf16 %v718, %v716
    %v752 = vpack.c.bf16 %v723, %v721
    %v753 = vpack.c.bf16 %v728, %v726
    %v754 = vpack.c.bf16 %v733, %v731
    %v755 = vpack.c.bf16 %v738, %v736
    %v756 = vpack.c.bf16 %v743, %v741
    %757 = vxpose.xlu0.c.b16.start [1/8] %v745, 128
    %758 = vxpose.xlu0.c.b16.cont [2/8] %v746, 128
    %759 = vxpose.xlu0.c.b16.cont [3/8] %v747, 128
    %760 = vxpose.xlu0.c.b16.cont [4/8] %v748, 128
    %761 = vxpose.xlu0.c.b16.cont [5/8] %v749, 128
    %762 = vxpose.xlu0.c.b16.cont [6/8] %v750, 128
    %763 = vxpose.xlu0.c.b16.cont [7/8] %v751, 128
    %764 = vxpose.xlu0.c.b16.end [8/8] %v752, 128
    %v765 = vpop.trf.xlu0
    %v766 = vpop.trf.xlu0
    %v767 = vpop.trf.xlu0
    %v768 = vpop.trf.xlu0
    %v769 = vpop.trf.xlu0
    %v770 = vpop.trf.xlu0
    %v771 = vpop.trf.xlu0
    %v772 = vpop.trf.xlu0
    %773 = vxpose.xlu0.c.b16.start [1/8] %v753, 128
    %774 = vxpose.xlu0.c.b16.cont [2/8] %v754, 128
    %775 = vxpose.xlu0.c.b16.cont [3/8] %v755, 128
    %776 = vxpose.xlu0.c.b16.cont [4/8] %v756, 128
    %777 = vxpose.xlu0.c.b16.cont [5/8] 0, 128
    %778 = vxpose.xlu0.c.b16.cont [6/8] 0, 128
    %779 = vxpose.xlu0.c.b16.cont [7/8] 0, 128
    %780 = vxpose.xlu0.c.b16.end [8/8] 0, 128
    %v781 = vpop.trf.xlu0
    %v782 = vpop.trf.xlu0
    %v783 = vpop.trf.xlu0
    %v784 = vpop.trf.xlu0
    %v785 = vpop.trf.xlu0
    %v786 = vpop.trf.xlu0
    %v787 = vpop.trf.xlu0
    %v788 = vpop.trf.xlu0
    %v813 = vunpack.c.l.b16 %v16
    %v814 = vunpack.c.l.b16 %v17
    %v815 = vunpack.c.l.b16 %v18
    %v816 = vunpack.c.l.b16 %v19
    %v817 = vunpack.c.l.b16 %v20
    %v818 = vunpack.c.l.b16 %v21
    %v819 = vunpack.c.l.b16 %v22
    %v820 = vunpack.c.l.b16 %v23
    %v821 = vunpack.c.l.b16 %v24
    %v822 = vunpack.c.l.b16 %v25
    %v823 = vunpack.c.l.b16 %v26
    %v824 = vunpack.c.l.b16 %v27
    %v825 = vunpack.c.l.b16 %v28
    %v826 = vunpack.c.l.b16 %v29
    %v827 = vunpack.c.l.b16 %v30
    %v828 = vunpack.c.l.b16 %v31
    %v829 = vunpack.c.l.b16 %v32
    %v830 = vunpack.c.l.b16 %v33
    %v831 = vunpack.c.l.b16 %v34
    %v832 = vunpack.c.l.b16 %v35
    %v833 = vunpack.c.l.b16 %v36
    %v834 = vunpack.c.l.b16 %v37
    %v835 = vunpack.c.l.b16 %v38
    %v836 = vunpack.c.l.b16 %v39
    %v837 = vpack.c.b16 %v814, %v813
    %v838 = vpack.c.b16 %v816, %v815
    %v839 = vpack.c.b16 %v818, %v817
    %v840 = vpack.c.b16 %v820, %v819
    %v841 = vpack.c.b16 %v822, %v821
    %v842 = vpack.c.b16 %v824, %v823
    %v843 = vpack.c.b16 %v826, %v825
    %v844 = vpack.c.b16 %v828, %v827
    %v845 = vpack.c.b16 %v830, %v829
    %v846 = vpack.c.b16 %v832, %v831
    %v847 = vpack.c.b16 %v834, %v833
    %v848 = vpack.c.b16 %v836, %v835
    %vm861 = vcmask 523264
    %v863 = vsel %vm861, %v781, 0
    %v866 = vsel %vm861, %v782, 0
    %v869 = vsel %vm861, %v783, 0
    %v872 = vsel %vm861, %v784, 0
    %v875 = vsel %vm861, %v785, 0
    %v878 = vsel %vm861, %v786, 0
    %v881 = vsel %vm861, %v787, 0
    %v884 = vsel %vm861, %v788, 0
    %886 = vmatpush.bf16.msra.mxu0 %v844
    %887 = vmatpush.bf16.msra.mxu0 %v843
    %888 = vmatpush.bf16.msra.mxu0 %v842
    %889 = vmatpush.bf16.msra.mxu0 %v841
    %890 = vmatpush.bf16.msra.mxu0 %v840
    %891 = vmatpush.bf16.msra.mxu0 %v839
    %892 = vmatpush.bf16.msra.mxu0 %v838
    %893 = vmatpush.bf16.msra.mxu0 %v837
    %894 = vmatmul.bf16.gmra.mxu0 %v765
    %v895 = vpop.f32.mrf.mxu0
    %v896 = vadd.f32 0.0, %v895
    %v897 = vpop.f32.mrf.mxu0
    %v898 = vadd.f32 0.0, %v897
    %899 = vmatmul.bf16.gmra.mxu0 %v766
    %v900 = vpop.f32.mrf.mxu0
    %v901 = vadd.f32 0.0, %v900
    %v902 = vpop.f32.mrf.mxu0
    %v903 = vadd.f32 0.0, %v902
    %904 = vmatmul.bf16.gmra.mxu0 %v767
    %v905 = vpop.f32.mrf.mxu0
    %v906 = vadd.f32 0.0, %v905
    %v907 = vpop.f32.mrf.mxu0
    %v908 = vadd.f32 0.0, %v907
    %909 = vmatmul.bf16.gmra.mxu0 %v768
    %v910 = vpop.f32.mrf.mxu0
    %v911 = vadd.f32 0.0, %v910
    %v912 = vpop.f32.mrf.mxu0
    %v913 = vadd.f32 0.0, %v912
    %914 = vmatmul.bf16.gmra.mxu0 %v769
    %v915 = vpop.f32.mrf.mxu0
    %v916 = vadd.f32 0.0, %v915
    %v917 = vpop.f32.mrf.mxu0
    %v918 = vadd.f32 0.0, %v917
    %919 = vmatmul.bf16.gmra.mxu0 %v770
    %v920 = vpop.f32.mrf.mxu0
    %v921 = vadd.f32 0.0, %v920
    %v922 = vpop.f32.mrf.mxu0
    %v923 = vadd.f32 0.0, %v922
    %924 = vmatmul.bf16.gmra.mxu0 %v771
    %v925 = vpop.f32.mrf.mxu0
    %v926 = vadd.f32 0.0, %v925
    %v927 = vpop.f32.mrf.mxu0
    %v928 = vadd.f32 0.0, %v927
    %929 = vmatmul.bf16.gmra.mxu0 %v772
    %v930 = vpop.f32.mrf.mxu0
    %v931 = vadd.f32 0.0, %v930
    %v932 = vpop.f32.mrf.mxu0
    %v933 = vadd.f32 0.0, %v932
    %934 = vdwg.mxu0
    %935 = vmatpush.bf16.msra.mxu0 0
    %936 = vmatpush.bf16.msra.mxu0 0
    %937 = vmatpush.bf16.msra.mxu0 0
    %938 = vmatpush.bf16.msra.mxu0 0
    %939 = vmatpush.bf16.msra.mxu0 %v848
    %940 = vmatpush.bf16.msra.mxu0 %v847
    %941 = vmatpush.bf16.msra.mxu0 %v846
    %942 = vmatpush.bf16.msra.mxu0 %v845
    %943 = vmatmul.bf16.gmra.mxu0 %v863
    %v944 = vpop.f32.mrf.mxu0
    %v945 = vadd.f32 %v896, %v944
    %v946 = vpop.f32.mrf.mxu0
    %v947 = vadd.f32 %v898, %v946
    %948 = vmatmul.bf16.gmra.mxu0 %v866
    %v949 = vpop.f32.mrf.mxu0
    %v950 = vadd.f32 %v901, %v949
    %v951 = vpop.f32.mrf.mxu0
    %v952 = vadd.f32 %v903, %v951
    %953 = vmatmul.bf16.gmra.mxu0 %v869
    %v954 = vpop.f32.mrf.mxu0
    %v955 = vadd.f32 %v906, %v954
    %v956 = vpop.f32.mrf.mxu0
    %v957 = vadd.f32 %v908, %v956
    %958 = vmatmul.bf16.gmra.mxu0 %v872
    %v959 = vpop.f32.mrf.mxu0
    %v960 = vadd.f32 %v911, %v959
    %v961 = vpop.f32.mrf.mxu0
    %v962 = vadd.f32 %v913, %v961
    %963 = vmatmul.bf16.gmra.mxu0 %v875
    %v964 = vpop.f32.mrf.mxu0
    %v965 = vadd.f32 %v916, %v964
    %v966 = vpop.f32.mrf.mxu0
    %v967 = vadd.f32 %v918, %v966
    %968 = vmatmul.bf16.gmra.mxu0 %v878
    %v969 = vpop.f32.mrf.mxu0
    %v970 = vadd.f32 %v921, %v969
    %v971 = vpop.f32.mrf.mxu0
    %v972 = vadd.f32 %v923, %v971
    %973 = vmatmul.bf16.gmra.mxu0 %v881
    %v974 = vpop.f32.mrf.mxu0
    %v975 = vadd.f32 %v926, %v974
    %v976 = vpop.f32.mrf.mxu0
    %v977 = vadd.f32 %v928, %v976
    %978 = vmatmul.bf16.gmra.mxu0 %v884
    %v979 = vpop.f32.mrf.mxu0
    %v980 = vadd.f32 %v931, %v979
    %v981 = vpop.f32.mrf.mxu0
    %v982 = vadd.f32 %v933, %v981
    %983 = vdwg.mxu0
    %v984 = vmul.f32 %v945, %v107
    %v985 = vmul.f32 %v947, %v107
    %v986 = vmul.f32 %v950, %v107
    %v987 = vmul.f32 %v952, %v107
    %v988 = vmul.f32 %v955, %v107
    %v989 = vmul.f32 %v957, %v107
    %v990 = vmul.f32 %v960, %v107
    %v991 = vmul.f32 %v962, %v107
    %v992 = vmul.f32 %v965, %v107
    %v993 = vmul.f32 %v967, %v107
    %v994 = vmul.f32 %v970, %v107
    %v995 = vmul.f32 %v972, %v107
    %v996 = vmul.f32 %v975, %v107
    %v997 = vmul.f32 %v977, %v107
    %v998 = vmul.f32 %v980, %v107
    %v999 = vmul.f32 %v982, %v107
    %v1000 = vpack.c.bf16 %v985, %v984
    %v1001 = vpack.c.bf16 %v987, %v986
    %v1002 = vpack.c.bf16 %v989, %v988
    %v1003 = vpack.c.bf16 %v991, %v990
    %v1004 = vpack.c.bf16 %v993, %v992
    %v1005 = vpack.c.bf16 %v995, %v994
    %v1006 = vpack.c.bf16 %v997, %v996
    %v1007 = vpack.c.bf16 %v999, %v998
    %1008 = vmatpush.bf16.xpose.msra.mxu0 %v1007
    %1009 = vmatpush.bf16.xpose.msra.mxu0 %v1006
    %1010 = vmatpush.bf16.xpose.msra.mxu0 %v1005
    %1011 = vmatpush.bf16.xpose.msra.mxu0 %v1004
    %1012 = vmatpush.bf16.xpose.msra.mxu0 %v1003
    %1013 = vmatpush.bf16.xpose.msra.mxu0 %v1002
    %1014 = vmatpush.bf16.xpose.msra.mxu0 %v1001
    %1015 = vmatpush.bf16.xpose.msra.mxu0 %v1000
    %1016 = vmatmul.bf16.gmra.mxu0 %v837
    %v1017 = vpop.f32.mrf.mxu0
    %v1018 = vadd.f32 0.0, %v1017
    %v1019 = vpop.f32.mrf.mxu0
    %v1020 = vadd.f32 0.0, %v1019
    %1021 = vmatmul.bf16.gmra.mxu0 %v838
    %v1022 = vpop.f32.mrf.mxu0
    %v1023 = vadd.f32 0.0, %v1022
    %v1024 = vpop.f32.mrf.mxu0
    %v1025 = vadd.f32 0.0, %v1024
    %1026 = vmatmul.bf16.gmra.mxu0 %v839
    %v1027 = vpop.f32.mrf.mxu0
    %v1028 = vadd.f32 0.0, %v1027
    %v1029 = vpop.f32.mrf.mxu0
    %v1030 = vadd.f32 0.0, %v1029
    %1031 = vmatmul.bf16.gmra.mxu0 %v840
    %v1032 = vpop.f32.mrf.mxu0
    %v1033 = vadd.f32 0.0, %v1032
    %v1034 = vpop.f32.mrf.mxu0
    %v1035 = vadd.f32 0.0, %v1034
    %1036 = vmatmul.bf16.gmra.mxu0 %v841
    %v1037 = vpop.f32.mrf.mxu0
    %v1038 = vadd.f32 0.0, %v1037
    %v1039 = vpop.f32.mrf.mxu0
    %v1040 = vadd.f32 0.0, %v1039
    %1041 = vmatmul.bf16.gmra.mxu0 %v842
    %v1042 = vpop.f32.mrf.mxu0
    %v1043 = vadd.f32 0.0, %v1042
    %v1044 = vpop.f32.mrf.mxu0
    %v1045 = vadd.f32 0.0, %v1044
    %1046 = vmatmul.bf16.gmra.mxu0 %v843
    %v1047 = vpop.f32.mrf.mxu0
    %v1048 = vadd.f32 0.0, %v1047
    %v1049 = vpop.f32.mrf.mxu0
    %v1050 = vadd.f32 0.0, %v1049
    %1051 = vmatmul.bf16.gmra.mxu0 %v844
    %v1052 = vpop.f32.mrf.mxu0
    %v1053 = vadd.f32 0.0, %v1052
    %v1054 = vpop.f32.mrf.mxu0
    %v1055 = vadd.f32 0.0, %v1054
    %1056 = vmatmul.bf16.gmra.mxu0 %v845
    %v1057 = vpop.f32.mrf.mxu0
    %v1058 = vadd.f32 0.0, %v1057
    %v1059 = vpop.f32.mrf.mxu0
    %v1060 = vadd.f32 0.0, %v1059
    %1061 = vmatmul.bf16.gmra.mxu0 %v846
    %v1062 = vpop.f32.mrf.mxu0
    %v1063 = vadd.f32 0.0, %v1062
    %v1064 = vpop.f32.mrf.mxu0
    %v1065 = vadd.f32 0.0, %v1064
    %1066 = vmatmul.bf16.gmra.mxu0 %v847
    %v1067 = vpop.f32.mrf.mxu0
    %v1068 = vadd.f32 0.0, %v1067
    %v1069 = vpop.f32.mrf.mxu0
    %v1070 = vadd.f32 0.0, %v1069
    %1071 = vmatmul.bf16.gmra.mxu0 %v848
    %v1072 = vpop.f32.mrf.mxu0
    %v1073 = vadd.f32 0.0, %v1072
    %v1074 = vpop.f32.mrf.mxu0
    %v1075 = vadd.f32 0.0, %v1074
    %1076 = vdwg.mxu0
    %v1077 = vmul.f32 %v1018, %v193
    %v1078 = vmul.f32 %v1020, %v207
    %v1079 = vmul.f32 %v1023, %v221
    %v1080 = vmul.f32 %v1025, %v235
    %v1081 = vmul.f32 %v1028, %v249
    %v1082 = vmul.f32 %v1030, %v263
    %v1083 = vmul.f32 %v1033, %v277
    %v1084 = vmul.f32 %v1035, %v291
    %v1085 = vmul.f32 %v1038, %v305
    %v1086 = vmul.f32 %v1040, %v319
    %v1087 = vmul.f32 %v1043, %v333
    %v1088 = vmul.f32 %v1045, %v347
    %v1089 = vmul.f32 %v1048, %v361
    %v1090 = vmul.f32 %v1050, %v375
    %v1091 = vmul.f32 %v1053, %v389
    %v1092 = vmul.f32 %v1055, %v403
    %v1093 = vmul.f32 %v1058, %v417
    %v1094 = vmul.f32 %v1060, %v431
    %v1095 = vmul.f32 %v1063, %v445
    %v1096 = vmul.f32 %v1065, %v459
    %v1097 = vmul.f32 %v1068, %v473
    %v1098 = vmul.f32 %v1070, %v487
    %v1099 = vmul.f32 %v1073, %v501
    %v1100 = vmul.f32 %v1075, %v515
    %1101 = vst [vmem:[#allocation2] sm:$0xff] %v1077
    %1102 = vst [vmem:[#allocation2 + $0x8] sm:$0xff] %v1078
    %1103 = vst [vmem:[#allocation2 + $0x10] sm:$0xff] %v1079
    %1104 = vst [vmem:[#allocation2 + $0x18] sm:$0xff] %v1080
    %1105 = vst [vmem:[#allocation2 + $0x20] sm:$0xff] %v1081
    %1106 = vst [vmem:[#allocation2 + $0x28] sm:$0xff] %v1082
    %1107 = vst [vmem:[#allocation2 + $0x30] sm:$0xff] %v1083
    %1108 = vst [vmem:[#allocation2 + $0x38] sm:$0xff] %v1084
    %1109 = vst [vmem:[#allocation2 + $0x40] sm:$0xff] %v1085
    %1110 = vst [vmem:[#allocation2 + $0x48] sm:$0xff] %v1086
    %1111 = vst [vmem:[#allocation2 + $0x50] sm:$0xff] %v1087
    %1112 = vst [vmem:[#allocation2 + $0x58] sm:$0xff] %v1088
    %1113 = vst [vmem:[#allocation2 + $0x60] sm:$0xff] %v1089
    %1114 = vst [vmem:[#allocation2 + $0x68] sm:$0xff] %v1090
    %1115 = vst [vmem:[#allocation2 + $0x70] sm:$0xff] %v1091
    %1116 = vst [vmem:[#allocation2 + $0x78] sm:$0xff] %v1092
    %1117 = vst [vmem:[#allocation2 + $0x80] sm:$0xff] %v1093
    %1118 = vst [vmem:[#allocation2 + $0x88] sm:$0xff] %v1094
    %1119 = vst [vmem:[#allocation2 + $0x90] sm:$0xff] %v1095
    %1120 = vst [vmem:[#allocation2 + $0x98] sm:$0xff] %v1096
    %1121 = vst [vmem:[#allocation2 + $0xa0] sm:$0xff] %v1097
    %1122 = vst [vmem:[#allocation2 + $0xa8] sm:$0xff] %v1098
    %1123 = vst [vmem:[#allocation2 + $0xb0] sm:$0xff] %v1099
    %1124 = vst [vmem:[#allocation2 + $0xb8] sm:$0xff] %v1100
    // Predicated region
    $region14: #{anchor_gcn_forward.1} parent=1 // pred_check
      _
    $region15: #{anchor_gcn_forward.1} parent=1 // pred_check_branch
      %1126 = sbr.rel (0) target = $region17
    $region16: #{anchor_gcn_forward.1} parent=1 // pred_region
      %1128 = vsyncadd [#allocation3], 0
      %s1129 = sshll.u32 [#allocation2], 4
      %s1130 = int_to_ptr.vmem [resolvable:$true] %s1129
      %s1131 = sshll.u32 %s3, 4
      %s1132 = int_to_ptr.hbm [resolvable:$true] %s1131
      %1137 = dma.vmem_to_hbm [thread:$0]  %s1130, 3072, %s1132, [#allocation3], 128, 128, 8
    $region17: #{anchor_gcn_forward.1} parent=1 // pred_fallthru
      _
    // Predicated region
    $region18: #{anchor_gcn_forward.1} parent=1 // pred_check
      _
    $region19: #{anchor_gcn_forward.1} parent=1 // pred_check_branch
      %1139 = sbr.rel (0) target = $region21
    $region20: #{anchor_gcn_forward.1} parent=1 // pred_region
      %1141 = dma.done [#allocation3], 3072
    $region21: #{anchor_gcn_forward.1} parent=1 // pred_fallthru
      _
    %1142 = vsyncpa [#allocation3], 1

</llo_original>
